<compile_context>
chip_gen: v7x
topology: tpu7x:2x2x1
jax: 0.10.0
libtpu: 0.0.40
codegen_flags: <defaults>
</compile_context>

<pallas_src>
import functools
import math

import jax
import jax.numpy as jnp
from jax import lax
from jax.experimental import pallas as pl
from jax.experimental.pallas import tpu as pltpu


_MIB = 1024 * 1024
_MAX_BLOCK_BYTES = 8 * _MIB     # upper bound on a single pipelined data block
_SPLIT_THRESHOLD = 2 * _MIB     # on multi-TC chips, split single-block schedules above this


def _round_up(x, m):
    return ((x + m - 1) // m) * m


def _sublane_multiple(dtype):
    """Packed-sublane multiple: 8 for 4-byte, 16 for 2-byte, 32 for 1-byte dtypes."""
    return max(8, 32 // max(1, jnp.dtype(dtype).itemsize))


def _has_multiple_tensorcores():
    """True for chips with >1 TensorCore per JAX device (v7x, v4/v5p megacore)."""
    try:
        kind = jax.devices()[0].device_kind.lower()
    except Exception:
        return False
    return ("v7" in kind) or ("v4" in kind) or ("v5p" in kind)


def _vmem_limit_bytes():
    """Generation-aware scoped-VMEM request (from hardware query, with safe fallback)."""
    cap = None
    try:
        cap = int(pltpu.get_tpu_info().vmem_capacity_bytes)
    except Exception:
        cap = None
    if not cap:
        cap = 64 * _MIB  # conservative fallback: smallest physical VMEM (v7x)
    # Never ask for more than ~5/8 of physical, and never more than 64 MiB.
    return int(min(64 * _MIB, (cap * 5) // 8))


def _pick_block_bytes(vmem_limit, param_bytes):
    """~4-8 MiB data blocks; footprint ~ 2x in + 2x out buffers + f32 temps = ~6x block."""
    usable = max(_MIB, vmem_limit - param_bytes - 2 * _MIB)   # 2 MiB headroom
    return int(max(_MIB, min(_MAX_BLOCK_BYTES, usable // 6)))


# --------------------------------------------------------------------------
# channels_last kernel: (tm, C) blocks, normalize over the lane (C) axis
# --------------------------------------------------------------------------
def _ln_lastdim_kernel(x_ref, w_ref, b_ref, o_ref, *, eps, c):
    # x_ref: (TM, C); w_ref / b_ref: (1, C) — broadcast over rows.
    x = x_ref[...].astype(jnp.float32)
    inv_c = jnp.float32(1.0 / c)
    s1 = jnp.sum(x, axis=-1, keepdims=True) * inv_c            # E[x]
    s2 = jnp.sum(x * x, axis=-1, keepdims=True) * inv_c        # E[x^2]
    var = jnp.maximum(s2 - s1 * s1, 0.0)                       # biased variance, clamped
    inv = lax.rsqrt(var + jnp.float32(eps))                    # (TM, 1)
    shift = s1 * inv                                           # (TM, 1)
    w = w_ref[...].astype(jnp.float32)                         # (1, C)
    b = b_ref[...].astype(jnp.float32)
    o_ref[...] = ((x * inv - shift) * w + b).astype(o_ref.dtype)


def _pick_row_tile(rows, c, itemsize, block_bytes, sub, multi_tc):
    """Row tile: multiple of the packed-sublane width, ~block_bytes-sized blocks."""
    row_bytes = max(1, c * itemsize)
    tm = max(sub, (block_bytes // row_bytes) // sub * sub)
    if tm < rows:
        return tm
    # Whole array fits in one block.
    if multi_tc and rows * row_bytes > _SPLIT_THRESHOLD and rows >= 2 * sub:
        # Split in two so both TensorCores get work and DMA/compute overlap exists.
        return _round_up(pl.cdiv(rows, 2), sub)
    return rows                                                # single full-extent block


def _layer_norm_channels_last_2d(x2, weight, bias, eps):
    rows, C = x2.shape
    itemsize = jnp.dtype(x2.dtype).itemsize
    sub = _sublane_multiple(x2.dtype)
    multi_tc = _has_multiple_tensorcores()
    vmem_limit = _vmem_limit_bytes()
    # Double-buffered (1, C) param blocks pad sublanes to 8 and lanes to 128.
    param_bytes = 2 * 2 * 8 * _round_up(C, 128) * jnp.dtype(weight.dtype).itemsize
    block_bytes = _pick_block_bytes(vmem_limit, param_bytes)
    tm = _pick_row_tile(rows, C, itemsize, block_bytes, sub, multi_tc)
    grid = (pl.cdiv(rows, tm),)                 # ragged last block is masked by Pallas

    w2 = weight.reshape(1, C)
    b2 = bias.reshape(1, C)

    kernel = functools.partial(_ln_lastdim_kernel, eps=eps, c=C)
    return pl.pallas_call(
        kernel,
        out_shape=jax.ShapeDtypeStruct((rows, C), x2.dtype),
        grid_spec=pltpu.PrefetchScalarGridSpec(
            num_scalar_prefetch=0,
            grid=grid,
            in_specs=[
                pl.BlockSpec((tm, C), lambda i: (i, 0)),
                pl.BlockSpec((1, C), lambda i: (0, 0)),
                pl.BlockSpec((1, C), lambda i: (0, 0)),
            ],
            out_specs=pl.BlockSpec((tm, C), lambda i: (i, 0)),
        ),
        compiler_params=pltpu.CompilerParams(
            dimension_semantics=("parallel",),
            vmem_limit_bytes=vmem_limit,
        ),
    )(x2, w2, b2)


# --------------------------------------------------------------------------
# channels_first kernel: (1, C, T) blocks of the (N, C, H*W) view.
# Normalize over the C (sublane) axis; H*W sits on the lane axis -> lane-dense
# loads/stores even for tiny C, and no NCHW<->NHWC transposes in HBM.
# --------------------------------------------------------------------------
def _ln_chfirst_kernel(x_ref, w_ref, b_ref, o_ref, *, eps, c):
    # x_ref: (1, C, T); w_ref / b_ref: (1, C, 1) — broadcast over lanes.
    x = x_ref[...].astype(jnp.float32)
    inv_c = jnp.float32(1.0 / c)
    s1 = jnp.sum(x, axis=1, keepdims=True) * inv_c             # (1, 1, T) — XLU reduce
    s2 = jnp.sum(x * x, axis=1, keepdims=True) * inv_c
    var = jnp.maximum(s2 - s1 * s1, 0.0)                       # biased variance, clamped
    inv = lax.rsqrt(var + jnp.float32(eps))                    # (1, 1, T)
    shift = s1 * inv
    w = w_ref[...].astype(jnp.float32)                         # (1, C, 1)
    b = b_ref[...].astype(jnp.float32)
    o_ref[...] = ((x * inv - shift) * w + b).astype(o_ref.dtype)


def _pick_lane_tile(hw, c, itemsize, block_bytes, n_batch, multi_tc):
    """Lane tile: multiple of 128, ~block_bytes-sized blocks; split on multi-TC if needed."""
    col_bytes = max(1, c * itemsize)
    t = max(128, (block_bytes // col_bytes) // 128 * 128)
    if t < hw:
        return t
    if multi_tc and n_batch < 2 and c * hw * itemsize > _SPLIT_THRESHOLD and hw >= 256:
        return _round_up(pl.cdiv(hw, 2), 128)
    return hw                                                  # full-extent block


def _layer_norm_channels_first(x, weight, bias, eps):
    assert x.ndim == 4, "channels_first path expects NCHW input"
    N, C, H, W = x.shape
    HW = H * W
    x3 = x.reshape(N, C, HW)                    # free view, no HBM transpose
    itemsize = jnp.dtype(x.dtype).itemsize
    multi_tc = _has_multiple_tensorcores()
    vmem_limit = _vmem_limit_bytes()
    # Double-buffered (1, C, 1) param blocks pad the lane dim to 128.
    param_bytes = 2 * 2 * _round_up(C, 8) * 128 * jnp.dtype(weight.dtype).itemsize
    block_bytes = _pick_block_bytes(vmem_limit, param_bytes)
    t = _pick_lane_tile(HW, C, itemsize, block_bytes, N, multi_tc)
    grid = (N, pl.cdiv(HW, t))                  # ragged last spatial block is masked

    w3 = weight.reshape(1, C, 1)
    b3 = bias.reshape(1, C, 1)

    kernel = functools.partial(_ln_chfirst_kernel, eps=eps, c=C)
    y3 = pl.pallas_call(
        kernel,
        out_shape=jax.ShapeDtypeStruct((N, C, HW), x.dtype),
        grid_spec=pltpu.PrefetchScalarGridSpec(
            num_scalar_prefetch=0,
            grid=grid,
            in_specs=[
                pl.BlockSpec((1, C, t), lambda n, j: (n, 0, j)),
                pl.BlockSpec((1, C, 1), lambda n, j: (0, 0, 0)),
                pl.BlockSpec((1, C, 1), lambda n, j: (0, 0, 0)),
            ],
            out_specs=pl.BlockSpec((1, C, t), lambda n, j: (n, 0, j)),
        ),
        compiler_params=pltpu.CompilerParams(
            dimension_semantics=("parallel", "parallel"),
            vmem_limit_bytes=vmem_limit,
        ),
    )(x3, w3, b3)
    return y3.reshape(N, C, H, W)


# --------------------------------------------------------------------------
# Public wrapper matching the PyTorch module's forward
# --------------------------------------------------------------------------
def layer_norm(x, weight, bias, eps=1e-6, data_format="channels_last"):
    if data_format not in ("channels_last", "channels_first"):
        raise NotImplementedError
    if data_format == "channels_first":
        return _layer_norm_channels_first(x, weight, bias, eps)

    C = x.shape[-1]
    rows = math.prod(x.shape[:-1])
    x2 = x.reshape(rows, C)
    y2 = _layer_norm_channels_last_2d(x2, weight, bias, eps)
    return y2.reshape(x.shape)


# --------------------------------------------------------------------------
# Pure-JAX reference for verification
# --------------------------------------------------------------------------
def _ref_layer_norm(x, weight, bias, eps, data_format):
    if data_format == "channels_last":
        u = jnp.mean(x, axis=-1, keepdims=True)
        s = jnp.mean((x - u) ** 2, axis=-1, keepdims=True)
        return (x - u) / jnp.sqrt(s + eps) * weight + bias
    else:
        u = jnp.mean(x, axis=1, keepdims=True)
        s = jnp.mean((x - u) ** 2, axis=1, keepdims=True)
        xn = (x - u) / jnp.sqrt(s + eps)
        return weight[:, None, None] * xn + bias[:, None, None]


if __name__ == "__main__":
    key = jax.random.PRNGKey(0)
    k1, k2 = jax.random.split(key)

    eps = 1e-6

    # ---- channels_first case: NCHW input, normalized over C ----
    N, C, H, W = 2, 4, 16, 16
    x_cf = jax.random.normal(k1, (N, C, H, W), dtype=jnp.float32)
    w_cf = jnp.ones((C,), jnp.float32) + 0.1 * jnp.arange(C, dtype=jnp.float32)
    b_cf = 0.05 * jnp.arange(C, dtype=jnp.float32)

    y_cf = layer_norm(x_cf, w_cf, b_cf, eps, data_format="channels_first")
    y_cf = jax.block_until_ready(y_cf)
    ref_cf = _ref_layer_norm(x_cf, w_cf, b_cf, eps, "channels_first")
    assert jnp.allclose(y_cf, ref_cf, atol=1e-4, rtol=1e-4)

    # ---- channels_last case: NHWC input, normalized over last dim ----
    N2, H2, W2, C2 = 2, 8, 8, 32
    x_cl = jax.random.normal(k2, (N2, H2, W2, C2), dtype=jnp.float32)
    w_cl = jnp.ones((C2,), jnp.float32) + 0.02 * jnp.arange(C2, dtype=jnp.float32)
    b_cl = 0.01 * jnp.arange(C2, dtype=jnp.float32)

    y_cl = layer_norm(x_cl, w_cl, b_cl, eps, data_format="channels_last")
    y_cl = jax.block_until_ready(y_cl)
    ref_cl = _ref_layer_norm(x_cl, w_cl, b_cl, eps, "channels_last")
    assert jnp.allclose(y_cl, ref_cl, atol=1e-4, rtol=1e-4)

    print("KERNEL_OK")
</pallas_src>

<mosaic_0001>
module attributes {stable_mosaic.version = 11 : i64} {
  func.func @_ln_chfirst_kernel(%arg0: i32, %arg1: i32, %arg2: memref<1x4x256xf32, #tpu.memory_space<vmem>>, %arg3: memref<1x4x1xf32, #tpu.memory_space<vmem>>, %arg4: memref<1x4x1xf32, #tpu.memory_space<vmem>>, %arg5: memref<1x4x256xf32, #tpu.memory_space<vmem>>) attributes {dimension_semantics = [#tpu.dimension_semantics<parallel>, #tpu.dimension_semantics<parallel>], iteration_bounds = array<i64: 2, 1>, scalar_prefetch = 0 : i64, scratch_operands = 0 : i64, tpu.core_type = #tpu.core_type<tc>, window_params = [{transform_indices = @transform_0, window_bounds = array<i64: 1, 4, 256>}, {pipeline_mode = #tpu.pipeline_mode<synchronous>, transform_indices = @transform_1, window_bounds = array<i64: 1, 4, 1>}, {pipeline_mode = #tpu.pipeline_mode<synchronous>, transform_indices = @transform_2, window_bounds = array<i64: 1, 4, 1>}, {transform_indices = @transform_3, window_bounds = array<i64: 1, 4, 256>}]} {
    %c0 = arith.constant 0 : index
    %c0_0 = arith.constant 0 : index
    %c0_1 = arith.constant 0 : index
    %0 = vector.load %arg2[%c0, %c0_0, %c0_1] : memref<1x4x256xf32, #tpu.memory_space<vmem>>, vector<1x4x256xf32>
    %cst = arith.constant dense<0.000000e+00> : vector<1x256xf32>
    %1 = vector.multi_reduction <add>, %0, %cst [1] : vector<1x4x256xf32> to vector<1x256xf32>
    %2 = vector.shape_cast %1 : vector<1x256xf32> to vector<1x1x256xf32>
    %cst_2 = arith.constant 2.500000e-01 : f32
    %3 = vector.broadcast %cst_2 : f32 to vector<1x1x256xf32>
    %4 = arith.mulf %2, %3 : vector<1x1x256xf32>
    %5 = arith.mulf %0, %0 : vector<1x4x256xf32>
    %cst_3 = arith.constant dense<0.000000e+00> : vector<1x256xf32>
    %6 = vector.multi_reduction <add>, %5, %cst_3 [1] : vector<1x4x256xf32> to vector<1x256xf32>
    %7 = vector.shape_cast %6 : vector<1x256xf32> to vector<1x1x256xf32>
    %cst_4 = arith.constant 2.500000e-01 : f32
    %8 = vector.broadcast %cst_4 : f32 to vector<1x1x256xf32>
    %9 = arith.mulf %7, %8 : vector<1x1x256xf32>
    %10 = arith.mulf %4, %4 : vector<1x1x256xf32>
    %11 = arith.subf %9, %10 : vector<1x1x256xf32>
    %cst_5 = arith.constant 0.000000e+00 : f32
    %12 = vector.broadcast %cst_5 : f32 to vector<1x1x256xf32>
    %13 = arith.maximumf %11, %12 : vector<1x1x256xf32>
    %cst_6 = arith.constant 9.99999997E-7 : f32
    %14 = vector.broadcast %cst_6 : f32 to vector<1x1x256xf32>
    %15 = arith.addf %13, %14 : vector<1x1x256xf32>
    %16 = math.rsqrt %15 : vector<1x1x256xf32>
    %17 = arith.mulf %4, %16 : vector<1x1x256xf32>
    %c0_7 = arith.constant 0 : index
    %c0_8 = arith.constant 0 : index
    %c0_9 = arith.constant 0 : index
    %18 = vector.load %arg3[%c0_7, %c0_8, %c0_9] : memref<1x4x1xf32, #tpu.memory_space<vmem>>, vector<1x4x1xf32>
    %c0_10 = arith.constant 0 : index
    %c0_11 = arith.constant 0 : index
    %c0_12 = arith.constant 0 : index
    %19 = vector.load %arg4[%c0_10, %c0_11, %c0_12] : memref<1x4x1xf32, #tpu.memory_space<vmem>>, vector<1x4x1xf32>
    %20 = vector.broadcast %16 : vector<1x1x256xf32> to vector<1x4x256xf32>
    %21 = arith.mulf %0, %20 : vector<1x4x256xf32>
    %22 = vector.broadcast %17 : vector<1x1x256xf32> to vector<1x4x256xf32>
    %23 = arith.subf %21, %22 : vector<1x4x256xf32>
    %24 = vector.broadcast %18 : vector<1x4x1xf32> to vector<1x4x256xf32>
    %25 = arith.mulf %23, %24 : vector<1x4x256xf32>
    %26 = vector.broadcast %19 : vector<1x4x1xf32> to vector<1x4x256xf32>
    %27 = arith.addf %25, %26 : vector<1x4x256xf32>
    %c0_13 = arith.constant 0 : index
    %c0_14 = arith.constant 0 : index
    %c0_15 = arith.constant 0 : index
    %28 = vector.load %arg5[%c0_13, %c0_14, %c0_15] : memref<1x4x256xf32, #tpu.memory_space<vmem>>, vector<1x4x256xf32>
    tpu.vector_store %arg5[%c0_13, %c0_14, %c0_15], %27 {strides = array<i32>} : memref<1x4x256xf32, #tpu.memory_space<vmem>>, vector<1x4x256xf32>,
    return
  }
  func.func @transform_0(%arg0: i32, %arg1: i32) -> (i32, i32, i32) {
    %c0_i32 = arith.constant 0 : i32
    %c0_i32_0 = arith.constant 0 : i32
    return %arg0, %c0_i32, %arg1 : i32, i32, i32
  }
  func.func @transform_1(%arg0: i32, %arg1: i32) -> (i32, i32, i32) {
    %c0_i32 = arith.constant 0 : i32
    %c0_i32_0 = arith.constant 0 : i32
    %c0_i32_1 = arith.constant 0 : i32
    %c0_i32_2 = arith.constant 0 : i32
    return %c0_i32, %c0_i32_0, %c0_i32_1 : i32, i32, i32
  }
  func.func @transform_2(%arg0: i32, %arg1: i32) -> (i32, i32, i32) {
    %c0_i32 = arith.constant 0 : i32
    %c0_i32_0 = arith.constant 0 : i32
    %c0_i32_1 = arith.constant 0 : i32
    %c0_i32_2 = arith.constant 0 : i32
    return %c0_i32, %c0_i32_0, %c0_i32_1 : i32, i32, i32
  }
  func.func @transform_3(%arg0: i32, %arg1: i32) -> (i32, i32, i32) {
    %c0_i32 = arith.constant 0 : i32
    %c0_i32_0 = arith.constant 0 : i32
    return %arg0, %c0_i32, %arg1 : i32, i32, i32
  }
}

</mosaic_0001>

<llo_original>
// kernel: tpu_custom_call.1
$region0: #{tpu_custom_call.1}
  #allocation0 [shape = 'u32[]', space=smem, size = 0x4, offset = 0x4, fixed_abs, tag = 'smem constant byte address 0x4 - core index']
  #allocation1 [shape = 'u32[144,128]{1,0:T(1,128)}', space=vmem, size = 0x12000, scoped, tag = 'internal scratch']
  %s0 = inlined_call_operand.hbm [shape: f32[2,4,256], index: 0, kind: input, shape index: {}]
  %s1 = inlined_call_operand.vmem [shape: f32[1,4,1], index: 1, kind: input, shape index: {}]
  %s2 = inlined_call_operand.vmem [shape: f32[1,4,1], index: 2, kind: input, shape index: {}]
  %s3 = inlined_call_operand.hbm [shape: f32[2,4,256], index: 3, kind: output, shape index: {}]
  %s4 = sld [smem:[#allocation0]]
  $region49: #{tpu_custom_call.1} parent=0
    _
  %s6 = ssub.s32 1, %s4
  %s7 = scalar_select 0, %s6, %s4
  $region1: #{tpu_custom_call.1} parent=0
    #allocation2 [shape = 'u8[8192]{0}', space=vmem, size = 0x2000, scoped, tag = 'input window, operand 0']
    #allocation3 [shape = 's32[2]{0}', space=sflag, size = 0x8, scoped, tag = 'scoped memory for tpu_custom_call.1']
    #allocation4 [shape = 's32[2]{0}', space=sflag, size = 0x8, scoped, tag = 'scoped memory for tpu_custom_call.1']
    #allocation5 [shape = 'u8[8192]{0}', space=vmem, size = 0x2000, scoped, tag = 'output window, operand 0']
    %8 = vsyncpa [#allocation3], 0
    %s9 = scalar_lea.sflag [#allocation3], 1
    %10 = vsyncpa %s9, 0
    %11 = vsyncpa [#allocation4], 0
    %s12 = scalar_lea.sflag [#allocation4], 1
    %13 = vsyncpa %s12, 0
    loop: start=0, step=1, limit=4
    $region2: #{tpu_custom_call.1} parent=1 // loop_pre_header
      _
    $region3: #{tpu_custom_call.1} parent=1 // loop_header
      %s15 = sphi 0, %s19
      %p16 = scmp.ge.s32.totalorder %s15, 4
      %s22 = sphi 0, %s34
      %s23 = sphi 0, %s30
      %s24 = sphi 0, %s22
      %s25 = sphi 0, %s23
      %s26 = sphi 0, %s24
      %s27 = sphi 0, %s25
      %s39 = sphi 0, %s41
      %s42 = sphi 0, %s39
      %s43 = sphi 0, %s42
      %s59 = sphi 0, %s43
      %s63 = sphi 0, %s63
      %s65 = sphi 0, %s63
      %s66 = sphi 0, %s65
      %s80 = sphi 0, %s66
      %s84 = sphi 0, %s84
      %s86 = sphi 0, %s84
      %s87 = sphi 0, %s86
      %s101 = sphi 0, %s87
      %s109 = sphi 0, %s111
      %s112 = sphi 0, %s109
      %s113 = sphi 0, %s112
      %s129 = sphi 0, %s113
    $region4: #{tpu_custom_call.1} parent=1 // loop_header_branch
      %18 = sbr.rel (%p16) target = $region8
    $region5: #{tpu_custom_call.1} parent=1 // loop_body
      %s20 = ssub.s32 %s15, 1
      %s21 = ssub.s32 %s15, 2
      %s28 = sadd.s32 1, %s23
      %p29 = scmp.ge.s32.totalorder %s28, 1
      %s30 = scalar_select %p29, 0, %s28
      %s31 = sadd.s32 1, %s22
      %s32 = scalar_select %p29, %s31, %s22
      %p33 = scmp.ge.s32.totalorder %s32, 2
      %s34 = scalar_select %p33, 0, %s32
      %s35 = ssub.s32 %s22, %s34
      %s36 = ssub.s32 %s23, %s30
      %s37 = sor.u32 %s35, %s36
      %p38 = scmp.eq.s32.totalorder %s37, 0
      %s40 = sadd.s32 %s39, 1
      %s41 = scalar_select %p38, %s39, %s40
      %p44 = pneg %p38
      %p45 = scmp.eq.s32.totalorder %s15, 1
      %p46 = por %p44, %p45
      %p47 = scmp.ne.s32.totalorder %s39, %s42
      %p48 = scmp.eq.s32.totalorder %s15, 0
      %p49 = por %p47, %p48
      %p50 = scmp.ne.s32.totalorder %s39, %s42
      %p51 = scmp.eq.s32.totalorder %s20, 1
      %p52 = por %p50, %p51
      %p53 = scmp.ne.s32.totalorder %s42, %s43
      %p54 = scmp.eq.s32.totalorder %s20, 0
      %p55 = por %p53, %p54
      %p56 = scmp.ne.s32.totalorder %s42, %s43
      %p57 = scmp.eq.s32.totalorder %s21, 1
      %p58 = por %p56, %p57
      %p60 = scmp.ne.s32.totalorder %s43, %s59
      %p61 = scmp.eq.s32.totalorder %s21, 0
      %p62 = por %p60, %p61
      %s64 = sadd.s32 %s63, 1
      %p67 = scmp.eq.s32.totalorder %s15, 1
      %p68 = scmp.ne.s32.totalorder %s63, %s65
      %p69 = scmp.eq.s32.totalorder %s15, 0
      %p70 = por %p68, %p69
      %p71 = scmp.ne.s32.totalorder %s63, %s65
      %p72 = scmp.eq.s32.totalorder %s20, 1
      %p73 = por %p71, %p72
      %p74 = scmp.ne.s32.totalorder %s65, %s66
      %p75 = scmp.eq.s32.totalorder %s20, 0
      %p76 = por %p74, %p75
      %p77 = scmp.ne.s32.totalorder %s65, %s66
      %p78 = scmp.eq.s32.totalorder %s21, 1
      %p79 = por %p77, %p78
      %p81 = scmp.ne.s32.totalorder %s66, %s80
      %p82 = scmp.eq.s32.totalorder %s21, 0
      %p83 = por %p81, %p82
      %s85 = sadd.s32 %s84, 1
      %p88 = scmp.eq.s32.totalorder %s15, 1
      %p89 = scmp.ne.s32.totalorder %s84, %s86
      %p90 = scmp.eq.s32.totalorder %s15, 0
      %p91 = por %p89, %p90
      %p92 = scmp.ne.s32.totalorder %s84, %s86
      %p93 = scmp.eq.s32.totalorder %s20, 1
      %p94 = por %p92, %p93
      %p95 = scmp.ne.s32.totalorder %s86, %s87
      %p96 = scmp.eq.s32.totalorder %s20, 0
      %p97 = por %p95, %p96
      %p98 = scmp.ne.s32.totalorder %s86, %s87
      %p99 = scmp.eq.s32.totalorder %s21, 1
      %p100 = por %p98, %p99
      %p102 = scmp.ne.s32.totalorder %s87, %s101
      %p103 = scmp.eq.s32.totalorder %s21, 0
      %p104 = por %p102, %p103
      %s105 = ssub.s32 %s22, %s34
      %s106 = ssub.s32 %s23, %s30
      %s107 = sor.u32 %s105, %s106
      %p108 = scmp.eq.s32.totalorder %s107, 0
      %s110 = sadd.s32 %s109, 1
      %s111 = scalar_select %p108, %s109, %s110
      %p114 = pneg %p108
      %p115 = scmp.eq.s32.totalorder %s15, 1
      %p116 = por %p114, %p115
      %p117 = scmp.ne.s32.totalorder %s109, %s112
      %p118 = scmp.eq.s32.totalorder %s15, 0
      %p119 = por %p117, %p118
      %p120 = scmp.ne.s32.totalorder %s109, %s112
      %p121 = scmp.eq.s32.totalorder %s20, 1
      %p122 = por %p120, %p121
      %p123 = scmp.ne.s32.totalorder %s112, %s113
      %p124 = scmp.eq.s32.totalorder %s20, 0
      %p125 = por %p123, %p124
      %p126 = scmp.ne.s32.totalorder %s112, %s113
      %p127 = scmp.eq.s32.totalorder %s21, 1
      %p128 = por %p126, %p127
      %p130 = scmp.ne.s32.totalorder %s113, %s129
      %p131 = scmp.eq.s32.totalorder %s21, 0
      %p132 = por %p130, %p131
      %p133 = scmp.le.s32.totalorder 1, %s15
      %p134 = scmp.lt.s32.totalorder %s15, 3
      %p135 = pnand %p133, %p134
      %p136 = pneg %p135
      // Predicated region
      $region9: #{tpu_custom_call.1} parent=5 // pred_check
        _
      $region10: #{tpu_custom_call.1} parent=5 // pred_check_branch
        %138 = sbr.rel (%p135) target = $region12
      $region11: #{tpu_custom_call.1} parent=5 // pred_region
        %s139 = ssub.s32 %s15, 1
        // Predicated region
        $region13: #{tpu_custom_call.1} parent=11 // pred_check
          %p140 = pneg %p76
        $region14: #{tpu_custom_call.1} parent=11 // pred_check_branch
          %142 = sbr.rel (%p140) target = $region16
        $region15: #{tpu_custom_call.1} parent=11 // pred_region
          _
        $region16: #{tpu_custom_call.1} parent=11 // pred_fallthru
          _
        // Predicated region
        $region17: #{tpu_custom_call.1} parent=11 // pred_check
          %p143 = pneg %p97
        $region18: #{tpu_custom_call.1} parent=11 // pred_check_branch
          %145 = sbr.rel (%p143) target = $region20
        $region19: #{tpu_custom_call.1} parent=11 // pred_region
          _
        $region20: #{tpu_custom_call.1} parent=11 // pred_fallthru
          _
      $region12: #{tpu_custom_call.1} parent=5 // pred_fallthru
        _
      %p146 = scmp.lt.s32.totalorder %s15, 2
      // Predicated region
      $region21: #{tpu_custom_call.1} parent=5 // pred_check
        %p147 = pneg %p146
      $region22: #{tpu_custom_call.1} parent=5 // pred_check_branch
        %149 = sbr.rel (%p147) target = $region24
      $region23: #{tpu_custom_call.1} parent=5 // pred_region
        // Predicated region
        $region25: #{tpu_custom_call.1} parent=23 // pred_check
          %p150 = pneg %p49
        $region26: #{tpu_custom_call.1} parent=23 // pred_check_branch
          %152 = sbr.rel (%p150) target = $region28
        $region27: #{tpu_custom_call.1} parent=23 // pred_region
          %s153 = sand.u32 %s39, 1
          %s154 = scalar_lea.sflag [#allocation3], %s153
          %s155 = sand.u32 %s39, 1
          %s156 = smul.addr %s155, 8
          %s157 = scalar_lea.vmem [#allocation2], %s156
          %s158 = smul.u32 2, %s23
          %s160 = ssub.s32 128, 128
          %161 = vsyncadd %s154, %s160
          %s162 = smul.addr %s22, 2
          %s163 = sadd.s32 %s158, %s162
          %s164 = smul.addr %s163, 64
          %s165 = scalar_lea.hbm %s0, %s164
          %s167 = sshll.u32 %s157, 4
          %s168 = int_to_ptr.vmem [resolvable:$true] %s167
          %170 = dma.hbm_to_vmem [thread:$0]  %s165, 128, %s168, %s154
        $region28: #{tpu_custom_call.1} parent=23 // pred_fallthru
          _
      $region24: #{tpu_custom_call.1} parent=5 // pred_fallthru
        _
      %p171 = scmp.le.s32.totalorder 1, %s15
      %p172 = scmp.lt.s32.totalorder %s15, 3
      %p173 = pnand %p171, %p172
      %p174 = pneg %p173
      // Predicated region
      $region29: #{tpu_custom_call.1} parent=5 // pred_check
        _
      $region30: #{tpu_custom_call.1} parent=5 // pred_check_branch
        %176 = sbr.rel (%p173) target = $region32
      $region31: #{tpu_custom_call.1} parent=5 // pred_region
        %s177 = ssub.s32 %s15, 1
        %s178 = sand.u32 %s42, 1
        %s179 = scalar_lea.sflag [#allocation3], %s178
        %s180 = sand.u32 %s42, 1
        %s181 = smul.addr %s180, 8
        %s182 = scalar_lea.vmem [#allocation2], %s181
        // Predicated region
        $region33: #{tpu_custom_call.1} parent=31 // pred_check
          %p183 = pneg %p55
        $region34: #{tpu_custom_call.1} parent=31 // pred_check_branch
          %185 = sbr.rel (%p183) target = $region36
        $region35: #{tpu_custom_call.1} parent=31 // pred_region
          %186 = dma.done %s179, 128
        $region36: #{tpu_custom_call.1} parent=31 // pred_fallthru
          _
        %s187 = sand.u32 %s42, 1
        %s188 = scalar_lea.sflag [#allocation3], %s187
        %s189 = sand.u32 %s42, 1
        %s190 = smul.addr %s189, 8
        %s191 = scalar_lea.vmem [#allocation2], %s190
        %p192 = pneg %p55
        %p193 = pneg %p52
        %p194 = pneg %p76
        %p195 = pneg %p73
        %p196 = pneg %p97
        %p197 = pneg %p94
        %p198 = pneg %p125
        %p199 = pneg %p122
        %s200 = sand.u32 %s112, 1
        %s201 = scalar_lea.sflag [#allocation4], %s200
        %s202 = sand.u32 %s112, 1
        %s203 = smul.addr %s202, 8
        %s204 = scalar_lea.vmem [#allocation5], %s203
        %s205 = smul.u32 2, %s25
        %s206 = smul.u32 2, %s25
        %v207 = vld [vmem:[%s182] sm:$0xff]
        %v209 = vcombine.high %v207, %v207
        %vm211 = vcmask 1043456
        %v212 = vsel %vm211, %v207, 0.0
        %v213 = vrot.slane %v212, 4
        %v214 = vadd.f32 %v212, %v213
        %v215 = vrot.slane %v214, 2
        %v216 = vadd.f32 %v214, %v215
        %v217 = vrot.slane %v216, 1
        %v218 = vadd.f32 %v216, %v217
        %v219 = vsel %vm211, %v209, 0.0
        %v220 = vrot.slane %v219, 4
        %v221 = vadd.f32 %v219, %v220
        %v222 = vrot.slane %v221, 2
        %v223 = vadd.f32 %v221, %v222
        %v224 = vrot.slane %v223, 1
        %v225 = vadd.f32 %v223, %v224
        %v226 = vmul.f32 %v218, 0.25
        %v227 = vmul.f32 %v225, 0.25
        %v228 = vmul.f32 %v207, %v207
        %v230 = vcombine.high %v228, %v228
        %v232 = vsel %vm211, %v228, 0.0
        %v233 = vrot.slane %v232, 4
        %v234 = vadd.f32 %v232, %v233
        %v235 = vrot.slane %v234, 2
        %v236 = vadd.f32 %v234, %v235
        %v237 = vrot.slane %v236, 1
        %v238 = vadd.f32 %v236, %v237
        %v239 = vsel %vm211, %v230, 0.0
        %v240 = vrot.slane %v239, 4
        %v241 = vadd.f32 %v239, %v240
        %v242 = vrot.slane %v241, 2
        %v243 = vadd.f32 %v241, %v242
        %v244 = vrot.slane %v243, 1
        %v245 = vadd.f32 %v243, %v244
        %v246 = vmul.f32 %v238, 0.25
        %v247 = vmul.f32 %v245, 0.25
        %v248 = vmul.f32 %v226, %v226
        %v249 = vmul.f32 %v227, %v227
        %v250 = vsub.f32 %v246, %v248
        %v251 = vsub.f32 %v247, %v249
        %v252 = vmax.f32 %v250, 0.0
        %v253 = vmax.f32 %v251, 0.0
        %v254 = vadd.f32 %v252, 1e-06
        %v255 = vadd.f32 %v253, 1e-06
        %v256 = vrsqrt.pop %v254
        %v257 = vrsqrt.pop %v255
        %v258 = vmul.f32 %v226, %v256
        %v259 = vmul.f32 %v227, %v257
        %v260 = vld [vmem:[%s1] sm:$0xf]
        %v261 = vld [vmem:[%s2] sm:$0xf]
        %v264 = vcombine.low %v256, %v257
        %v266 = vmul.f32 %v207, %v264
        %v269 = vcombine.low %v258, %v259
        %v271 = vsub.f32 %v266, %v269
        %273 = vset.pattern.permute.xlu0 0
        %274 = vperm.xlu0 %273, %v260
        %v275 = vpop.permute.xlu0 %274
        %v277 = vunpack.c.l.s4 839922192
        %v278 = vunpack.c.0.s8 %v277
        %v279 = vlaneseq
        %v280 = vshrl.u32 %v279, 7
        %v281 = vsub.s32 %v278, %v280
        %v282 = vrot.slane %v275, %v281
        %v284 = vmul.f32 %v271, %v282
        %286 = vset.pattern.permute.xlu0 0
        %287 = vperm.xlu0 %286, %v261
        %v288 = vpop.permute.xlu0 %287
        %v290 = vunpack.c.l.s4 839922192
        %v291 = vunpack.c.0.s8 %v290
        %v292 = vlaneseq
        %v293 = vshrl.u32 %v292, 7
        %v294 = vsub.s32 %v291, %v293
        %v295 = vrot.slane %v288, %v294
        %v297 = vadd.f32 %v284, %v295
        %298 = vst [vmem:[%s204] sm:$0xff] %v297
        %s299 = sand.u32 %s112, 1
        %s300 = scalar_lea.sflag [#allocation4], %s299
        %s301 = sand.u32 %s112, 1
        %s302 = smul.addr %s301, 8
        %s303 = scalar_lea.vmem [#allocation5], %s302
        // Predicated region
        $region37: #{tpu_custom_call.1} parent=31 // pred_check
          %p304 = pneg %p122
        $region38: #{tpu_custom_call.1} parent=31 // pred_check_branch
          %306 = sbr.rel (%p304) target = $region40
        $region39: #{tpu_custom_call.1} parent=31 // pred_region
          %s307 = smul.u32 2, %s25
          %s309 = ssub.s32 128, 128
          %310 = vsyncadd %s300, %s309
          %s311 = smul.addr %s24, 2
          %s312 = sadd.s32 %s307, %s311
          %s313 = smul.addr %s312, 64
          %s314 = scalar_lea.hbm %s3, %s313
          %s316 = sshll.u32 %s303, 4
          %s317 = int_to_ptr.vmem [resolvable:$true] %s316
          %319 = dma.vmem_to_hbm [thread:$0]  %s317, 128, %s314, %s300
        $region40: #{tpu_custom_call.1} parent=31 // pred_fallthru
          _
      $region32: #{tpu_custom_call.1} parent=5 // pred_fallthru
        _
      %p320 = scmp.le.s32.totalorder 2, %s15
      // Predicated region
      $region41: #{tpu_custom_call.1} parent=5 // pred_check
        %p321 = pneg %p320
      $region42: #{tpu_custom_call.1} parent=5 // pred_check_branch
        %323 = sbr.rel (%p321) target = $region44
      $region43: #{tpu_custom_call.1} parent=5 // pred_region
        %s324 = ssub.s32 %s15, 2
        // Predicated region
        $region45: #{tpu_custom_call.1} parent=43 // pred_check
          %p325 = pneg %p128
        $region46: #{tpu_custom_call.1} parent=43 // pred_check_branch
          %327 = sbr.rel (%p325) target = $region48
        $region47: #{tpu_custom_call.1} parent=43 // pred_region
          %s328 = sand.u32 %s113, 1
          %s329 = scalar_lea.sflag [#allocation4], %s328
          %s330 = sand.u32 %s113, 1
          %s331 = smul.addr %s330, 8
          %s332 = scalar_lea.vmem [#allocation5], %s331
          %333 = dma.done %s329, 128
        $region48: #{tpu_custom_call.1} parent=43 // pred_fallthru
          _
      $region44: #{tpu_custom_call.1} parent=5 // pred_fallthru
        _
    $region6: #{tpu_custom_call.1} parent=1 // loop_footer
      %s19 = sadd.s32 1, %s15
    $region7: #{tpu_custom_call.1} parent=1 // loop_footer_branch
      %14 = sbr.rel target = $region3
    $region8: #{tpu_custom_call.1} parent=1 // loop_exit
      _
    %334 = vsyncpa [#allocation3], 1
    %s335 = scalar_lea.sflag [#allocation3], 1
    %336 = vsyncpa %s335, 1
    %337 = vsyncpa [#allocation4], 1
    %s338 = scalar_lea.sflag [#allocation4], 1
    %339 = vsyncpa %s338, 1

</llo_original>
